<compile_context>
chip_gen: v6e
topology: v6e:2x2x1
jax: 0.10.0
libtpu: 0.0.40
codegen_flags: <defaults>
</compile_context>

<pallas_src>
import functools

import jax
import jax.numpy as jnp
from jax.experimental import pallas as pl
from jax.experimental.pallas import tpu as pltpu


def _simam_kernel(x_ref, o_ref, *, inv_hw, inv_n, e_lambda):
    """One (tr, HW) tile: per-row SimAM over the full spatial axis."""
    x = x_ref[...].astype(jnp.float32)                      # (tr, HW)

    # Per-row spatial mean (f32 accumulation).
    mu = jnp.sum(x, axis=-1, keepdims=True) * inv_hw        # (tr, 1)

    d = x - mu
    d2 = d * d
    s = jnp.sum(d2, axis=-1, keepdims=True)                 # (tr, 1)

    # energy: y = d2 / (4 * (s / n + e_lambda)) + 0.5 , n = H*W - 1.
    # Denominator is per-row only -> exact reciprocal is essentially free and
    # keeps parity with the PyTorch reference tight.
    inv_denom = 1.0 / (4.0 * (s * inv_n + e_lambda))        # (tr, 1)
    y = d2 * inv_denom + 0.5

    # NOTE: for tiny, VMEM-resident maps on v5e the EUP (sigmoid exp) can
    # become the binding unit; for typical CNN shapes this stays HBM-bound.
    o_ref[...] = (x * jax.nn.sigmoid(y)).astype(o_ref.dtype)


def _vmem_budgets():
    """(tile_budget_bytes, vmem_limit_bytes) chosen per TPU generation."""
    cap = None
    try:
        cap = getattr(pltpu.get_tpu_info(), "vmem_capacity_bytes", None)
    except Exception:
        cap = None
    if cap is None:
        cap = 64 << 20                      # assume the smallest (v7x) if unknown
    if cap >= (96 << 20):                   # v5e / v6e: 128 MiB physical VMEM
        return 48 << 20, 96 << 20
    return 20 << 20, 32 << 20               # v7x: 64 MiB physical VMEM


def _choose_row_tile(rows, hw, itemsize, budget_bytes, sublane):
    """Largest row tile fitting the budget, then shrunk to keep >= ~8 grid steps.

    Per row: double-buffered in + out blocks in the I/O dtype (4x itemsize)
    plus ~3 f32 temporaries (x upcast, d2, activation) in compiler scratch.
    """
    per_row = hw * (4 * itemsize + 3 * 4)
    tr = max(1, budget_bytes // per_row)
    if tr >= rows:
        tr = rows                           # full extent: no %sublane requirement
    else:
        tr = max(sublane, (tr // sublane) * sublane)

    # Keep several grid steps alive for pipeline depth / v7x megacore sharding
    # whenever the row count allows it.
    target_steps = 8
    while tr > sublane and pl.cdiv(rows, tr) < target_steps:
        tr_new = max(sublane, ((tr // 2) // sublane) * sublane)
        if tr_new == tr:
            break
        tr = tr_new
    return tr


def simam(x, e_lambda=1e-4):
    """SimAM forward pass. x: (B, C, H, W) array (NCHW)."""
    b, c, h, w = x.shape
    hw = h * w
    # TODO(synk): the PyTorch reference divides by n = H*W - 1 = 0 for 1x1
    # feature maps (producing inf/nan); guard with max(..., 1) here instead of
    # reproducing the divide-by-zero.
    n = max(hw - 1, 1)

    rows = b * c
    x_flat = x.reshape(rows, hw)            # free (contiguous) reshape, no HBM pass

    itemsize = x.dtype.itemsize
    sublane = max(8, 32 // itemsize)        # 8 for f32, 16 for bf16, 32 for int8

    tile_budget, vmem_limit = _vmem_budgets()
    tr = _choose_row_tile(rows, hw, itemsize, tile_budget, sublane)
    grid = (pl.cdiv(rows, tr),)

    kernel = functools.partial(
        _simam_kernel,
        inv_hw=1.0 / hw,
        inv_n=1.0 / n,
        e_lambda=float(e_lambda),
    )

    out_flat = pl.pallas_call(
        kernel,
        out_shape=jax.ShapeDtypeStruct((rows, hw), x.dtype),
        grid_spec=pltpu.PrefetchScalarGridSpec(
            num_scalar_prefetch=0,
            grid=grid,
            # Last block dim == full array dim -> no pad/slice needed even when
            # hw % 128 != 0 (masked tail store only).
            in_specs=[pl.BlockSpec((tr, hw), lambda i: (i, 0))],
            out_specs=pl.BlockSpec((tr, hw), lambda i: (i, 0)),
        ),
        compiler_params=pltpu.CompilerParams(
            dimension_semantics=("parallel",),
            vmem_limit_bytes=vmem_limit,
        ),
    )(x_flat)

    return out_flat.reshape(b, c, h, w)


def _simam_ref(x, e_lambda=1e-4):
    """Pure-JAX reference mirroring the PyTorch module."""
    b, c, h, w = x.shape
    n = max(w * h - 1, 1)
    mu = jnp.mean(x, axis=(2, 3), keepdims=True)
    d2 = (x - mu) ** 2
    y = d2 / (4.0 * (jnp.sum(d2, axis=(2, 3), keepdims=True) / n + e_lambda)) + 0.5
    return x * jax.nn.sigmoid(y)


if __name__ == "__main__":
    key = jax.random.PRNGKey(0)

    # Case 1: H*W a multiple of 128 (fully lane-dense stores).
    x = jax.random.normal(key, (2, 4, 16, 16), dtype=jnp.float32)
    out = simam(x)
    jax.block_until_ready(out)
    ref = _simam_ref(x)
    assert out.shape == x.shape and out.dtype == x.dtype
    assert jnp.allclose(out, ref, atol=1e-4, rtol=1e-4)

    # Case 2: 7x7 feature map (H*W = 49, masked tail store — no pad/slice pass).
    x2 = jax.random.normal(jax.random.PRNGKey(1), (1, 8, 7, 7), dtype=jnp.float32)
    out2 = simam(x2)
    jax.block_until_ready(out2)
    ref2 = _simam_ref(x2)
    assert out2.shape == x2.shape and out2.dtype == x2.dtype
    assert jnp.allclose(out2, ref2, atol=1e-4, rtol=1e-4)

    # Case 3: rows (B*C = 10) not a multiple of the row tile -> partial edge
    # block path (garbage rows read, outputs discarded).
    x3 = jax.random.normal(jax.random.PRNGKey(2), (2, 5, 14, 14), dtype=jnp.float32)
    out3 = simam(x3)
    jax.block_until_ready(out3)
    ref3 = _simam_ref(x3)
    assert out3.shape == x3.shape and out3.dtype == x3.dtype
    assert jnp.allclose(out3, ref3, atol=1e-4, rtol=1e-4)

    print("KERNEL_OK")
</pallas_src>

<mosaic_0001>
module attributes {stable_mosaic.version = 11 : i64} {
  func.func @_simam_kernel(%arg0: i32, %arg1: memref<8x256xf32, #tpu.memory_space<vmem>>, %arg2: memref<8x256xf32, #tpu.memory_space<vmem>>) attributes {dimension_semantics = [#tpu.dimension_semantics<parallel>], iteration_bounds = array<i64: 1>, scalar_prefetch = 0 : i64, scratch_operands = 0 : i64, tpu.core_type = #tpu.core_type<tc>, window_params = [{transform_indices = @transform_0, window_bounds = array<i64: 8, 256>}, {transform_indices = @transform_1, window_bounds = array<i64: 8, 256>}]} {
    %c0 = arith.constant 0 : index
    %c0_0 = arith.constant 0 : index
    %0 = vector.load %arg1[%c0, %c0_0] : memref<8x256xf32, #tpu.memory_space<vmem>>, vector<8x256xf32>
    %cst = arith.constant dense<0.000000e+00> : vector<8xf32>
    %1 = vector.multi_reduction <add>, %0, %cst [1] : vector<8x256xf32> to vector<8xf32>
    %2 = vector.shape_cast %1 : vector<8xf32> to vector<8x1xf32>
    %cst_1 = arith.constant 3.906250e-03 : f32
    %3 = vector.broadcast %cst_1 : f32 to vector<8x1xf32>
    %4 = arith.mulf %2, %3 : vector<8x1xf32>
    %5 = vector.broadcast %4 : vector<8x1xf32> to vector<8x256xf32>
    %6 = arith.subf %0, %5 : vector<8x256xf32>
    %7 = arith.mulf %6, %6 : vector<8x256xf32>
    %cst_2 = arith.constant dense<0.000000e+00> : vector<8xf32>
    %8 = vector.multi_reduction <add>, %7, %cst_2 [1] : vector<8x256xf32> to vector<8xf32>
    %9 = vector.shape_cast %8 : vector<8xf32> to vector<8x1xf32>
    %cst_3 = arith.constant 0.00392156886 : f32
    %10 = vector.broadcast %cst_3 : f32 to vector<8x1xf32>
    %11 = arith.mulf %9, %10 : vector<8x1xf32>
    %cst_4 = arith.constant 9.99999974E-5 : f32
    %12 = vector.broadcast %cst_4 : f32 to vector<8x1xf32>
    %13 = arith.addf %11, %12 : vector<8x1xf32>
    %cst_5 = arith.constant 4.000000e+00 : f32
    %14 = vector.broadcast %cst_5 : f32 to vector<8x1xf32>
    %15 = arith.mulf %14, %13 : vector<8x1xf32>
    %cst_6 = arith.constant 1.000000e+00 : f32
    %16 = vector.broadcast %cst_6 : f32 to vector<8x1xf32>
    %17 = arith.divf %16, %15 : vector<8x1xf32>
    %18 = vector.broadcast %17 : vector<8x1xf32> to vector<8x256xf32>
    %19 = arith.mulf %7, %18 : vector<8x256xf32>
    %cst_7 = arith.constant 5.000000e-01 : f32
    %20 = vector.broadcast %cst_7 : f32 to vector<8x256xf32>
    %21 = arith.addf %19, %20 : vector<8x256xf32>
    %22 = arith.negf %21 : vector<8x256xf32>
    %23 = math.exp %22 : vector<8x256xf32>
    %cst_8 = arith.constant 1.000000e+00 : f32
    %24 = vector.broadcast %cst_8 : f32 to vector<8x256xf32>
    %25 = arith.addf %24, %23 : vector<8x256xf32>
    %26 = arith.divf %24, %25 : vector<8x256xf32>
    %27 = arith.mulf %0, %26 : vector<8x256xf32>
    %c0_9 = arith.constant 0 : index
    %c0_10 = arith.constant 0 : index
    %28 = vector.load %arg2[%c0_9, %c0_10] : memref<8x256xf32, #tpu.memory_space<vmem>>, vector<8x256xf32>
    tpu.vector_store %arg2[%c0_9, %c0_10], %27 {strides = array<i32>} : memref<8x256xf32, #tpu.memory_space<vmem>>, vector<8x256xf32>,
    return
  }
  func.func @transform_0(%arg0: i32) -> (i32, i32) {
    %c0_i32 = arith.constant 0 : i32
    %c0_i32_0 = arith.constant 0 : i32
    return %arg0, %c0_i32 : i32, i32
  }
  func.func @transform_1(%arg0: i32) -> (i32, i32) {
    %c0_i32 = arith.constant 0 : i32
    %c0_i32_0 = arith.constant 0 : i32
    return %arg0, %c0_i32 : i32, i32
  }
}

</mosaic_0001>

<llo_original>
// kernel: tpu_custom_call.1
$region0: #{tpu_custom_call.1}
  #allocation0 [shape = 'u32[]', space=smem, size = 0x4, offset = 0x4, fixed_abs, tag = 'smem constant byte address 0x4 - core index']
  #allocation1 [shape = 'u32[144,128]{1,0:T(1,128)}', space=vmem, size = 0x12000, scoped, tag = 'internal scratch']
  %s0 = inlined_call_operand.hbm [shape: f32[8,256], index: 0, kind: input, shape index: {}]
  %s1 = inlined_call_operand.hbm [shape: f32[8,256], index: 1, kind: output, shape index: {}]
  %s2 = sld [smem:[#allocation0]]
  $region18: #{tpu_custom_call.1} parent=0
    _
  %s4 = ssub.s32 1, %s2
  %s5 = scalar_select 0, %s4, %s2
  $region1: #{tpu_custom_call.1} parent=0
    #allocation2 [shape = 'u8[8192]{0}', space=vmem, size = 0x2000, scoped, tag = 'input window, operand 0, single buffered']
    #allocation3 [shape = 's32[1]{0}', space=sflag, size = 0x4, scoped, tag = 'scoped memory for tpu_custom_call.1']
    #allocation4 [shape = 's32[1]{0}', space=sflag, size = 0x4, scoped, tag = 'scoped memory for tpu_custom_call.1']
    #allocation5 [shape = 'u8[8192]{0}', space=vmem, size = 0x2000, scoped, tag = 'output window, operand 0, single buffered']
    %6 = vsyncpa [#allocation3], 0
    %7 = vsyncpa [#allocation4], 0
    // Predicated region
    $region2: #{tpu_custom_call.1} parent=1 // pred_check
      _
    $region3: #{tpu_custom_call.1} parent=1 // pred_check_branch
      %9 = sbr.rel (0) target = $region5
    $region4: #{tpu_custom_call.1} parent=1 // pred_region
      %s11 = ssub.s32 256, 256
      %12 = vsyncadd [#allocation3], %s11
      %s14 = sshll.u32 [#allocation2], 4
      %s15 = int_to_ptr.vmem [resolvable:$true] %s14
      %17 = dma.hbm_to_vmem [thread:$0]  %s0, 256, %s15, [#allocation3]
    $region5: #{tpu_custom_call.1} parent=1 // pred_fallthru
      _
    // Predicated region
    $region6: #{tpu_custom_call.1} parent=1 // pred_check
      _
    $region7: #{tpu_custom_call.1} parent=1 // pred_check_branch
      %19 = sbr.rel (0) target = $region9
    $region8: #{tpu_custom_call.1} parent=1 // pred_region
      %20 = dma.done [#allocation3], 256
    $region9: #{tpu_custom_call.1} parent=1 // pred_fallthru
      _
    %v21 = vld [vmem:[#allocation2] sm:$0xff]
    %v22 = vld [vmem:[#allocation2 + $0x8] sm:$0xff]
    %v23 = vadd.f32 %v21, %v22
    %24 = vadd.xlane.f32.xlu0 %v23
    %v25 = vpop.xlane.xlu0 %24
    %v26 = vmul.f32 %v25, 0.00390625
    %v27 = vsub.f32 %v21, %v26
    %v28 = vsub.f32 %v22, %v26
    %v29 = vmul.f32 %v27, %v27
    %v30 = vmul.f32 %v28, %v28
    %v31 = vadd.f32 %v29, %v30
    %32 = vadd.xlane.f32.xlu0 %v31
    %v33 = vpop.xlane.xlu0 %32
    %v34 = vmul.f32 %v33, 0.003921569
    %v35 = vadd.f32 %v34, 0.0001
    %v36 = vmul.f32 %v35, 4.0
    %v37 = vrcp.pop %v36
    %v38 = vmul.f32 1.0, %v37
    %v39 = vmul.f32 %v29, %v38
    %v40 = vmul.f32 %v30, %v38
    %v41 = vadd.f32 %v39, 0.5
    %v42 = vadd.f32 %v40, 0.5
    %v43 = vxor.u32 %v41, 2147483648
    %v44 = vxor.u32 %v42, 2147483648
    %v45 = vmul.f32 %v43, 1.442695
    %v46 = vpow.pop %v45
    %v47 = vmul.f32 %v44, 1.442695
    %v48 = vpow.pop %v47
    %v49 = vadd.f32 %v46, 1.0
    %v50 = vadd.f32 %v48, 1.0
    %v51 = vrcp.pop %v49
    %v52 = vmul.f32 1.0, %v51
    %v53 = vrcp.pop %v50
    %v54 = vmul.f32 1.0, %v53
    %v55 = vmul.f32 %v21, %v52
    %v56 = vmul.f32 %v22, %v54
    %57 = vst [vmem:[#allocation5] sm:$0xff] %v55
    %58 = vst [vmem:[#allocation5 + $0x8] sm:$0xff] %v56
    // Predicated region
    $region10: #{tpu_custom_call.1} parent=1 // pred_check
      _
    $region11: #{tpu_custom_call.1} parent=1 // pred_check_branch
      %60 = sbr.rel (0) target = $region13
    $region12: #{tpu_custom_call.1} parent=1 // pred_region
      %s62 = ssub.s32 256, 256
      %63 = vsyncadd [#allocation4], %s62
      %s65 = sshll.u32 [#allocation5], 4
      %s66 = int_to_ptr.vmem [resolvable:$true] %s65
      %68 = dma.vmem_to_hbm [thread:$0]  %s66, 256, %s1, [#allocation4]
    $region13: #{tpu_custom_call.1} parent=1 // pred_fallthru
      _
    // Predicated region
    $region14: #{tpu_custom_call.1} parent=1 // pred_check
      _
    $region15: #{tpu_custom_call.1} parent=1 // pred_check_branch
      %70 = sbr.rel (0) target = $region17
    $region16: #{tpu_custom_call.1} parent=1 // pred_region
      %71 = dma.done [#allocation4], 256
    $region17: #{tpu_custom_call.1} parent=1 // pred_fallthru
      _
    %72 = vsyncpa [#allocation3], 1
    %73 = vsyncpa [#allocation4], 1

</llo_original>
